<compile_context>
chip_gen: v7x
topology: tpu7x:2x2x1
jax: 0.10.0
libtpu: 0.0.40
codegen_flags: <defaults>
</compile_context>

<pallas_src>
import functools

import jax
import jax.numpy as jnp
from jax.experimental import pallas as pl
from jax.experimental.pallas import tpu as pltpu

_LANE = 128
_SUBLANE = 8
_MIB = 1024 * 1024


def _round_up(v, m):
    return ((v + m - 1) // m) * m


def _round_down(v, m):
    return (v // m) * m


@functools.lru_cache(maxsize=1)
def _vmem_budgets():
    """Generation-aware (scoped VMEM limit, double-buffered working-set budget)."""
    try:
        cap = int(pltpu.get_tpu_info().vmem_capacity_bytes)
    except Exception:  # non-TPU trace / older API: assume the smallest (v7x per-TC) VMEM
        cap = 64 * _MIB
    # v5e/v6e (128 MiB physical): limit 96 MiB, budget 48 MiB.
    # v7x (64 MiB per TC):        limit 48 MiB, budget 24 MiB.
    limit = min(96 * _MIB, (cap * 3) // 4)
    budget = limit // 2
    return limit, budget


# -----------------------------------------------------------------------------
# Single-pass path: the whole reduction axis (dim 0) stays resident per block.
# -----------------------------------------------------------------------------
def _softmax0_kernel(x_ref, o_ref):
    e = jnp.exp(x_ref[...].astype(jnp.float32))
    part = jnp.sum(e, axis=0, keepdims=True)          # sum over dim 0, keepdim=True
    inv = pl.reciprocal(part, approx=False)           # one recip per lane column
    o_ref[...] = (e * inv).astype(o_ref.dtype)


def _choose_tn_single_pass(M, N, itemsize, budget):
    """Lane tile with full reduction axis resident. 0 => fall back to two-pass."""
    per_col = M * (4 * itemsize + 8)   # in/out blocks double-buffered + f32 temps
    max_cols = budget // per_col
    if N <= _LANE:
        return N if max_cols >= N else 0
    n_padded = _round_up(N, _LANE)
    tn_cap = min(_round_down(max_cols, _LANE), 2048)
    if tn_cap < _LANE:
        return 0
    tn = min(tn_cap, n_padded)
    # Prefer >= 4 roughly-balanced grid steps (pipelining + both v7x TCs) while keeping
    # tn >= 512 lanes; else >= 2 steps at >= 256 lanes; else a single wide step.
    for steps, min_tn in ((4, 512), (2, 256)):
        cand = _round_down(n_padded // steps, _LANE)
        if cand >= min_tn:
            tn = min(tn, cand)
            break
    if tn >= n_padded:
        tn = N   # single step: full lane extent -> no padded lanes, unmasked DMA
    return tn


def _softmax0_single_pass(x, tn, vmem_limit):
    M, N = x.shape
    itemsize = jnp.dtype(x.dtype).itemsize
    return pl.pallas_call(
        _softmax0_kernel,
        out_shape=jax.ShapeDtypeStruct((M, N), x.dtype),
        grid_spec=pltpu.PrefetchScalarGridSpec(
            num_scalar_prefetch=0,
            grid=(pl.cdiv(N, tn),),
            in_specs=[pl.BlockSpec((M, tn), lambda j: (0, j))],
            out_specs=pl.BlockSpec((M, tn), lambda j: (0, j)),
        ),
        compiler_params=pltpu.CompilerParams(
            dimension_semantics=("parallel",),
            vmem_limit_bytes=vmem_limit,
        ),
        cost_estimate=pl.CostEstimate(
            flops=2 * M * N, transcendentals=M * N,
            bytes_accessed=2 * M * N * itemsize),
    )(x)


# -----------------------------------------------------------------------------
# Two-pass path for large M:
#   pass 1: read x, accumulate (1, N) column sums of exp(x)   (no exp intermediate!)
#   pass 2: re-read x, recompute exp, scale by 1/colsum, write output.
# -----------------------------------------------------------------------------
def _colsum_kernel(x_ref, s_ref, *, m_total, tm, mask_rows):
    mi = pl.program_id(1)

    @pl.when(mi == 0)
    def _():
        s_ref[...] = jnp.zeros_like(s_ref)

    e = jnp.exp(x_ref[...].astype(jnp.float32))
    if mask_rows:
        # Only the last (remainder) M block pays for the iota/compare/select.
        last = pl.num_programs(1) - 1

        @pl.when(mi == last)
        def _():
            row = jax.lax.broadcasted_iota(jnp.int32, e.shape, 0) + mi * tm
            em = jnp.where(row < m_total, e, 0.0)
            s_ref[...] = s_ref[...] + jnp.sum(em, axis=0, keepdims=True)

        @pl.when(mi != last)
        def _():
            s_ref[...] = s_ref[...] + jnp.sum(e, axis=0, keepdims=True)
    else:
        s_ref[...] = s_ref[...] + jnp.sum(e, axis=0, keepdims=True)


def _scale_kernel(x_ref, s_ref, o_ref):
    e = jnp.exp(x_ref[...].astype(jnp.float32))        # recompute: EUP slack, free vs HBM
    inv = pl.reciprocal(s_ref[...], approx=False)
    o_ref[...] = (e * inv).astype(o_ref.dtype)


def _choose_two_pass_tiles(M, N, itemsize, budget):
    cap = 1024
    if N <= cap:
        tn = N                       # full lane extent: no padding past N
    else:
        tn = cap                     # multiple of 128; remainder block handles the tail
    per_row = tn * (4 * itemsize + 8)   # x (x2 bufs) + out (x2 bufs) + f32 exp temp
    tm = _round_down(budget // per_row, _SUBLANE)
    tm = max(_SUBLANE, min(tm, _round_up(M, _SUBLANE)))
    if tm >= M:
        tm = M                       # full sublane extent: no padded rows, no masking
    return tm, tn


def _softmax0_two_pass(x, tm, tn, vmem_limit):
    M, N = x.shape
    itemsize = jnp.dtype(x.dtype).itemsize
    grid = (pl.cdiv(N, tn), pl.cdiv(M, tm))   # reduction (M) axis last / innermost
    mask_rows = (M % tm) != 0

    # Pass 1: column sums only (resident (1, tn) accumulator across the M axis).
    colsum = pl.pallas_call(
        functools.partial(_colsum_kernel, m_total=M, tm=tm, mask_rows=mask_rows),
        out_shape=jax.ShapeDtypeStruct((1, N), jnp.float32),
        grid_spec=pltpu.PrefetchScalarGridSpec(
            num_scalar_prefetch=0,
            grid=grid,
            in_specs=[pl.BlockSpec((tm, tn), lambda ni, mi: (mi, ni))],
            out_specs=pl.BlockSpec((1, tn), lambda ni, mi: (0, ni)),
        ),
        compiler_params=pltpu.CompilerParams(
            dimension_semantics=("parallel", "arbitrary"),
            vmem_limit_bytes=vmem_limit,
        ),
        cost_estimate=pl.CostEstimate(
            flops=M * N, transcendentals=M * N,
            bytes_accessed=M * N * itemsize + 4 * N),
    )(x)

    # Pass 2: recompute exp and scale by the reciprocal of the column sums.
    return pl.pallas_call(
        _scale_kernel,
        out_shape=jax.ShapeDtypeStruct((M, N), x.dtype),
        grid_spec=pltpu.PrefetchScalarGridSpec(
            num_scalar_prefetch=0,
            grid=grid,
            in_specs=[
                pl.BlockSpec((tm, tn), lambda ni, mi: (mi, ni)),
                pl.BlockSpec((1, tn), lambda ni, mi: (0, ni)),
            ],
            out_specs=pl.BlockSpec((tm, tn), lambda ni, mi: (mi, ni)),
        ),
        compiler_params=pltpu.CompilerParams(
            dimension_semantics=("parallel", "parallel"),
            vmem_limit_bytes=vmem_limit,
        ),
        cost_estimate=pl.CostEstimate(
            flops=2 * M * N, transcendentals=M * N,
            bytes_accessed=2 * M * N * itemsize + 4 * N),
    )(x, colsum)


# -----------------------------------------------------------------------------
# Dedicated lane-dense path for rank-1 inputs: view (M,) as (M//128, 128) and do a
# full (both-axes) reduction in one block. Avoids a (M, 1) layout with 1/128 lane
# utilization and masked partial stores.
# -----------------------------------------------------------------------------
def _softmax_vec_kernel(x_ref, o_ref):
    e = jnp.exp(x_ref[...].astype(jnp.float32))
    s = jnp.sum(e, axis=(0, 1), keepdims=True)          # full reduction -> (1, 1)
    o_ref[...] = (e * pl.reciprocal(s, approx=False)).astype(o_ref.dtype)


def _softmax_rank1_dense(x, vmem_limit):
    M = x.shape[0]
    rows = M // _LANE
    x2 = x.reshape(rows, _LANE)
    out = pl.pallas_call(
        _softmax_vec_kernel,
        out_shape=jax.ShapeDtypeStruct((rows, _LANE), x.dtype),
        grid_spec=pltpu.PrefetchScalarGridSpec(
            num_scalar_prefetch=0,
            grid=(1,),
            in_specs=[pl.BlockSpec((rows, _LANE), lambda i: (0, 0))],
            out_specs=pl.BlockSpec((rows, _LANE), lambda i: (0, 0)),
        ),
        compiler_params=pltpu.CompilerParams(
            dimension_semantics=("arbitrary",),
            vmem_limit_bytes=vmem_limit,
        ),
    )(x2)
    return out.reshape(M)


# -----------------------------------------------------------------------------
# Public wrapper
# -----------------------------------------------------------------------------
def my_softmax(x, *, force_two_pass=False, two_pass_tiles=None):
    """Reproduces torch: exp(x) / exp(x).sum(0, keepdim=True) for any rank >= 1."""
    vmem_limit, budget = _vmem_budgets()
    orig_shape = x.shape
    M = orig_shape[0]
    itemsize = jnp.dtype(x.dtype).itemsize

    # Rank-1 lane-dense fast path.
    if (x.ndim == 1 and not force_two_pass and M % _LANE == 0
            and M * (2 * itemsize + 8) <= budget):
        return _softmax_rank1_dense(x, vmem_limit)
    # TODO(synk): extend the lane-dense rank-1 path to non-multiple-of-128 / huge vectors
    # (currently they fall back to the generic (M, 1) layout below).

    x2d = x.reshape(M, -1)
    N = x2d.shape[1]

    tn = 0 if force_two_pass else _choose_tn_single_pass(M, N, itemsize, budget)
    if tn > 0:
        out2d = _softmax0_single_pass(x2d, tn, vmem_limit)
    else:
        if two_pass_tiles is not None:
            tm, tn2 = two_pass_tiles
        else:
            tm, tn2 = _choose_two_pass_tiles(M, N, itemsize, budget)
        out2d = _softmax0_two_pass(x2d, tm, tn2, vmem_limit)
    return out2d.reshape(orig_shape)


def _reference(x):
    e = jnp.exp(x)
    return e / jnp.sum(e, axis=0, keepdims=True)


if __name__ == "__main__":
    key = jax.random.PRNGKey(0)
    ks = jax.random.split(key, 6)

    # 1) Small 2-D, N < 128: single-pass, full-extent lane block.
    x1 = jax.random.normal(ks[0], (8, 32), dtype=jnp.float32)
    o1 = jax.block_until_ready(my_softmax(x1))
    assert o1.shape == x1.shape and o1.dtype == x1.dtype
    assert jnp.allclose(o1, _reference(x1), atol=1e-5, rtol=1e-5), "small-shape mismatch"

    # 2) Single-pass, N not a multiple of 128 -> full-extent lane block (no padding).
    x2 = jax.random.normal(ks[1], (16, 200), dtype=jnp.float32)
    o2 = jax.block_until_ready(my_softmax(x2))
    assert jnp.allclose(o2, _reference(x2), atol=1e-5, rtol=1e-5), "single-pass mismatch"

    # 3) Rank-3 input: softmax over dim 0, trailing dims flattened into lanes.
    x3 = jax.random.normal(ks[2], (4, 8, 32), dtype=jnp.float32)
    o3 = jax.block_until_ready(my_softmax(x3))
    assert jnp.allclose(o3, _reference(x3), atol=1e-5, rtol=1e-5), "rank-3 mismatch"

    # 4) Two-pass path (forced) with sublane + lane remainders -> masked colsum branch.
    x4 = jax.random.normal(ks[3], (40, 200), dtype=jnp.float32)
    o4 = jax.block_until_ready(
        my_softmax(x4, force_two_pass=True, two_pass_tiles=(16, 128)))
    assert jnp.allclose(o4, _reference(x4), atol=1e-5, rtol=1e-5), "two-pass (masked) mismatch"

    # 5) Two-pass path (forced), exact tiling -> unmasked (no-iota) colsum branch.
    x5 = jax.random.normal(ks[4], (32, 256), dtype=jnp.float32)
    o5 = jax.block_until_ready(
        my_softmax(x5, force_two_pass=True, two_pass_tiles=(16, 128)))
    assert jnp.allclose(o5, _reference(x5), atol=1e-5, rtol=1e-5), "two-pass (exact) mismatch"

    # 6) Rank-1 lane-dense fast path.
    x6 = jax.random.normal(ks[5], (256,), dtype=jnp.float32)
    o6 = jax.block_until_ready(my_softmax(x6))
    assert jnp.allclose(o6, _reference(x6), atol=1e-5, rtol=1e-5), "rank-1 mismatch"

    print("KERNEL_OK")
</pallas_src>

<mosaic_0001>
module attributes {stable_mosaic.version = 11 : i64} {
  func.func @_softmax0_kernel(%arg0: i32, %arg1: memref<8x32xf32, #tpu.memory_space<vmem>>, %arg2: memref<8x32xf32, #tpu.memory_space<vmem>>) attributes {dimension_semantics = [#tpu.dimension_semantics<parallel>], iteration_bounds = array<i64: 1>, scalar_prefetch = 0 : i64, scratch_operands = 0 : i64, tpu.core_type = #tpu.core_type<tc>, window_params = [{transform_indices = @transform_0, window_bounds = array<i64: 8, 32>}, {transform_indices = @transform_1, window_bounds = array<i64: 8, 32>}]} {
    %c0 = arith.constant 0 : index
    %c0_0 = arith.constant 0 : index
    %0 = vector.load %arg1[%c0, %c0_0] : memref<8x32xf32, #tpu.memory_space<vmem>>, vector<8x32xf32>
    %1 = math.exp %0 : vector<8x32xf32>
    %cst = arith.constant dense<0.000000e+00> : vector<32xf32>
    %2 = vector.multi_reduction <add>, %1, %cst [0] : vector<8x32xf32> to vector<32xf32>
    %3 = vector.shape_cast %2 : vector<32xf32> to vector<1x32xf32>
    %4 = tpu.reciprocal %3 : vector<1x32xf32> -> vector<1x32xf32>
    %5 = vector.broadcast %4 : vector<1x32xf32> to vector<8x32xf32>
    %6 = arith.mulf %1, %5 : vector<8x32xf32>
    %c0_1 = arith.constant 0 : index
    %c0_2 = arith.constant 0 : index
    %7 = vector.load %arg2[%c0_1, %c0_2] : memref<8x32xf32, #tpu.memory_space<vmem>>, vector<8x32xf32>
    tpu.vector_store %arg2[%c0_1, %c0_2], %6 {strides = array<i32>} : memref<8x32xf32, #tpu.memory_space<vmem>>, vector<8x32xf32>,
    return
  }
  func.func @transform_0(%arg0: i32) -> (i32, i32) {
    %c0_i32 = arith.constant 0 : i32
    %c0_i32_0 = arith.constant 0 : i32
    return %c0_i32, %arg0 : i32, i32
  }
  func.func @transform_1(%arg0: i32) -> (i32, i32) {
    %c0_i32 = arith.constant 0 : i32
    %c0_i32_0 = arith.constant 0 : i32
    return %c0_i32, %arg0 : i32, i32
  }
}

</mosaic_0001>

<llo_original>
// kernel: tpu_custom_call.1
$region0: #{tpu_custom_call.1}
  #allocation0 [shape = 'u32[]', space=smem, size = 0x4, offset = 0x4, fixed_abs, tag = 'smem constant byte address 0x4 - core index']
  #allocation1 [shape = 'u32[144,128]{1,0:T(1,128)}', space=vmem, size = 0x12000, scoped, tag = 'internal scratch']
  %s0 = inlined_call_operand.hbm [shape: f32[8,32], index: 0, kind: input, shape index: {}]
  %s1 = inlined_call_operand.hbm [shape: f32[8,32], index: 1, kind: output, shape index: {}]
  %s2 = sld [smem:[#allocation0]]
  $region18: #{tpu_custom_call.1} parent=0
    _
  %s4 = ssub.s32 1, %s2
  %s5 = scalar_select 0, %s4, %s2
  $region1: #{tpu_custom_call.1} parent=0
    #allocation2 [shape = 'u8[4096]{0}', space=vmem, size = 0x1000, scoped, tag = 'input window, operand 0, single buffered']
    #allocation3 [shape = 's32[1]{0}', space=sflag, size = 0x4, scoped, tag = 'scoped memory for tpu_custom_call.1']
    #allocation4 [shape = 's32[1]{0}', space=sflag, size = 0x4, scoped, tag = 'scoped memory for tpu_custom_call.1']
    #allocation5 [shape = 'u8[4096]{0}', space=vmem, size = 0x1000, scoped, tag = 'output window, operand 0, single buffered']
    %6 = vsyncpa [#allocation3], 0
    %7 = vsyncpa [#allocation4], 0
    // Predicated region
    $region2: #{tpu_custom_call.1} parent=1 // pred_check
      _
    $region3: #{tpu_custom_call.1} parent=1 // pred_check_branch
      %9 = sbr.rel (0) target = $region5
    $region4: #{tpu_custom_call.1} parent=1 // pred_region
      %s11 = ssub.s32 128, 128
      %12 = vsyncadd [#allocation3], %s11
      %s14 = sshll.u32 [#allocation2], 4
      %s15 = int_to_ptr.vmem [resolvable:$true] %s14
      %17 = dma.hbm_to_vmem [thread:$0]  %s0, 128, %s15, [#allocation3]
    $region5: #{tpu_custom_call.1} parent=1 // pred_fallthru
      _
    // Predicated region
    $region6: #{tpu_custom_call.1} parent=1 // pred_check
      _
    $region7: #{tpu_custom_call.1} parent=1 // pred_check_branch
      %19 = sbr.rel (0) target = $region9
    $region8: #{tpu_custom_call.1} parent=1 // pred_region
      %20 = dma.done [#allocation3], 128
    $region9: #{tpu_custom_call.1} parent=1 // pred_fallthru
      _
    %v21 = vld [vmem:[#allocation2] sm:$0xff]
    %v22 = vmul.f32 %v21, 1.442695
    %v23 = vpow.pop %v22
    %vm24 = vcmask 261120
    %v25 = vsel %vm24, %v23, 0.0
    %v26 = vrot.slane %v25, 4
    %v27 = vadd.f32 %v25, %v26
    %v28 = vrot.slane %v27, 2
    %v29 = vadd.f32 %v27, %v28
    %v30 = vrot.slane %v29, 1
    %v31 = vadd.f32 %v29, %v30
    %v32 = vrcp.pop %v31
    %v33 = vmul.f32 %v23, %v32
    %34 = vst.msk [vmem:[#allocation5] sm:$0xff] %vm24, %v33
    // Predicated region
    $region10: #{tpu_custom_call.1} parent=1 // pred_check
      _
    $region11: #{tpu_custom_call.1} parent=1 // pred_check_branch
      %36 = sbr.rel (0) target = $region13
    $region12: #{tpu_custom_call.1} parent=1 // pred_region
      %s38 = ssub.s32 128, 128
      %39 = vsyncadd [#allocation4], %s38
      %s41 = sshll.u32 [#allocation5], 4
      %s42 = int_to_ptr.vmem [resolvable:$true] %s41
      %44 = dma.vmem_to_hbm [thread:$0]  %s42, 128, %s1, [#allocation4]
    $region13: #{tpu_custom_call.1} parent=1 // pred_fallthru
      _
    // Predicated region
    $region14: #{tpu_custom_call.1} parent=1 // pred_check
      _
    $region15: #{tpu_custom_call.1} parent=1 // pred_check_branch
      %46 = sbr.rel (0) target = $region17
    $region16: #{tpu_custom_call.1} parent=1 // pred_region
      %47 = dma.done [#allocation4], 128
    $region17: #{tpu_custom_call.1} parent=1 // pred_fallthru
      _
    %48 = vsyncpa [#allocation3], 1
    %49 = vsyncpa [#allocation4], 1

</llo_original>
